<compile_context>
chip_gen: v7x
topology: tpu7x:2x2x1
jax: 0.10.0
libtpu: 0.0.40
codegen_flags: <defaults>
</compile_context>

<pallas_src>
import jax
import jax.numpy as jnp
from jax.experimental import pallas as pl
from jax.experimental.pallas import tpu as pltpu


# ----------------------------------------------------------------------------
# Kernel
# ----------------------------------------------------------------------------
def _cae_kernel(x_ref,
                w1_ref, b1_ref,
                w2_ref, b2_ref,
                w34_ref, b34_ref,
                w5_ref, b5_ref,
                w6_ref, b6_ref,
                o_ref):
    # Load the tiny weight / bias blocks once per grid step (hoisted out of
    # the per-image unroll below).
    layers = (
        (w1_ref[...],  b1_ref[...],  True),   # conv1 (+folded BN) + ReLU
        (w2_ref[...],  b2_ref[...],  True),   # conv2 (+folded BN) + ReLU
        (w34_ref[...], b34_ref[...], True),   # fused conv3 -> conv4 (+BN) + ReLU
        (w5_ref[...],  b5_ref[...],  True),   # conv5 (+folded BN) + ReLU
        (w6_ref[...],  b6_ref[...],  False),  # conv6 (no BN / ReLU)
    )

    t_n = x_ref.shape[0]
    for n in range(t_n):                      # static unroll over packed images
        h = x_ref[n]                          # (C_in, t_pix)
        for w, b, relu in layers:
            # bf16 streamed operands, f32 MXU accumulation, f32 epilogue.
            y = jnp.dot(w, h.astype(w.dtype), preferred_element_type=jnp.float32)
            y = y + b                          # b: (C_out, 1) broadcast over lanes
            if relu:
                y = jnp.maximum(y, 0.0)
            h = y
        o_ref[n] = h.astype(o_ref.dtype)       # (C_in, t_pix), lane-dense store


def _full_spec(shape):
    nd = len(shape)
    return pl.BlockSpec(shape, lambda b, p, _nd=nd: (0,) * _nd)


def _round_up(x, m):
    return (x + m - 1) // m * m


# ----------------------------------------------------------------------------
# Wrapper
# ----------------------------------------------------------------------------
def feat_cae_forward(x_nchw, kernel_params, *, t_pix=None, t_n=None,
                     vmem_budget_bytes=36 * 1024 * 1024,
                     vmem_limit_bytes=48 * 1024 * 1024):
    """x_nchw: (N, C_in, H, W). Returns (N, C_in, H, W) in x's dtype."""
    N, C_in, H, W = x_nchw.shape
    HW = H * W
    # NCHW -> (N, C, H*W): pure view of contiguous data, no transpose.
    x3 = x_nchw.reshape(N, C_in, HW)

    ws = kernel_params[0::2]
    out_dtype = x_nchw.dtype
    in_b = jnp.dtype(x_nchw.dtype).itemsize
    out_b = jnp.dtype(out_dtype).itemsize
    act_b = jnp.dtype(ws[0].dtype).itemsize

    # Peak live set per pixel: bf16 layer input + f32 dot result + f32 epilogue.
    peak_act = max(act_b * w.shape[1] + 8 * w.shape[0] for w in ws)
    param_bytes = 2 * sum(int(p.size) * jnp.dtype(p.dtype).itemsize
                          for p in kernel_params)

    hw_tile = _round_up(HW, 128)

    # ---- lane tile: as large as the VMEM budget allows -----------------------
    if t_pix is None:
        per_pix = 2 * C_in * (in_b + out_b) + peak_act   # 2x-buffered in/out + live acts
        budget = max(vmem_budget_bytes - param_bytes, 128 * per_pix)
        t_pix = budget // per_pix
        t_pix = max(128, min(8192, (t_pix // 128) * 128))
    t_pix = min(t_pix, hw_tile)

    # ---- batch packing for small feature maps -------------------------------
    if t_n is None:
        target_lanes = 2048
        t_n = 1
        if t_pix >= hw_tile and hw_tile < target_lanes and N > 1:
            t_n = min(N, max(1, target_lanes // hw_tile))
    t_n = max(1, min(int(t_n), N))

    # ---- keep >= 2 grid steps when possible (feed both v7x TensorCores) -----
    def n_steps(tn, tp):
        return pl.cdiv(N, tn) * pl.cdiv(HW, tp)

    while t_n > 1 and n_steps(t_n, t_pix) < 2:
        t_n = max(1, t_n // 2)
    while t_pix > 128 and n_steps(t_n, t_pix) < 2:
        t_pix = max(128, ((t_pix // 2) // 128) * 128)

    grid = (pl.cdiv(N, t_n), pl.cdiv(HW, t_pix))   # tails are masked by Pallas

    io_spec = pl.BlockSpec((t_n, C_in, t_pix), lambda b, p: (b, 0, p))
    in_specs = [io_spec] + [_full_spec(prm.shape) for prm in kernel_params]

    out = pl.pallas_call(
        _cae_kernel,
        out_shape=jax.ShapeDtypeStruct((N, C_in, HW), out_dtype),
        grid=grid,
        in_specs=in_specs,
        out_specs=io_spec,
        compiler_params=pltpu.CompilerParams(
            dimension_semantics=("parallel", "parallel"),
            vmem_limit_bytes=vmem_limit_bytes),
    )(x3, *kernel_params)

    return out.reshape(N, C_in, H, W)


# ----------------------------------------------------------------------------
# Parameters
# ----------------------------------------------------------------------------
def init_params(key, in_channels, latent_dim):
    """Raw PyTorch-style parameters: 6 x (W (Co,Ci), b (Co,), bn) with
    bn = (gamma, beta, running_mean, running_var) or None."""
    c0 = in_channels
    c1 = (in_channels + 2 * latent_dim) // 2
    c2 = 2 * latent_dim
    c3 = latent_dim
    dims = [(c0, c1), (c1, c2), (c2, c3), (c3, c2), (c2, c1), (c1, c0)]
    has_bn = (True, True, False, True, True, False)

    keys = jax.random.split(key, 6 * 6)
    params = []
    for li, (ci, co) in enumerate(dims):
        kw, kb, kg, kbeta, km, kv = keys[6 * li:6 * li + 6]
        bound = 1.0 / (ci ** 0.5)
        w = jax.random.uniform(kw, (co, ci), jnp.float32, -bound, bound)
        b = jax.random.uniform(kb, (co,), jnp.float32, -bound, bound)
        bn = None
        if has_bn[li]:
            gamma = 1.0 + 0.1 * jax.random.normal(kg, (co,), jnp.float32)
            beta = 0.1 * jax.random.normal(kbeta, (co,), jnp.float32)
            mean = 0.1 * jax.random.normal(km, (co,), jnp.float32)
            var = jax.random.uniform(kv, (co,), jnp.float32, 0.5, 1.5)
            bn = (gamma, beta, mean, var)
        params.append((w, b, bn))
    return params


def prepare_kernel_params(raw_params, *, eps=1e-5, compute_dtype=jnp.bfloat16):
    """Fold eval-mode BN into conv weights/biases, fuse layers 3 & 4, cast
    weights to the MXU compute dtype. Returns the 10-tuple consumed by the
    kernel: (w1,b1, w2,b2, w34,b34, w5,b5, w6,b6)."""
    folded = []
    for (w, b, bn) in raw_params:
        if bn is not None:
            gamma, beta, mean, var = bn
            scale = gamma / jnp.sqrt(var + eps)
            w = w * scale[:, None]
            b = (b - mean) * scale + beta
        folded.append((w, b))

    (w1, b1), (w2, b2), (w3, b3), (w4, b4), (w5, b5), (w6, b6) = folded
    # No nonlinearity between encoder layer 3 and decoder layer 4: fuse.
    w34 = w4 @ w3                 # (2L, 2L)
    b34 = w4 @ b3 + b4

    packed = []
    for w, b in ((w1, b1), (w2, b2), (w34, b34), (w5, b5), (w6, b6)):
        packed += [w.astype(compute_dtype), b.reshape(-1, 1).astype(jnp.float32)]
    return tuple(packed)


# ----------------------------------------------------------------------------
# Pure-JAX references
# ----------------------------------------------------------------------------
def feat_cae_ref(x_nchw, raw_params, eps=1e-5):
    """f32 (HIGHEST precision) reference of the original 6-layer module,
    eval-mode BN."""
    N, C, H, W = x_nchw.shape
    h = x_nchw.reshape(N, C, H * W).astype(jnp.float32)
    relu_flags = (True, True, False, True, True, False)
    for (w, b, bn), relu in zip(raw_params, relu_flags):
        h = jnp.einsum('oc,ncp->nop', w, h,
                       precision=jax.lax.Precision.HIGHEST) + b[None, :, None]
        if bn is not None:
            gamma, beta, mean, var = bn
            scale = gamma / jnp.sqrt(var + eps)
            h = (h - mean[None, :, None]) * scale[None, :, None] + beta[None, :, None]
        if relu:
            h = jnp.maximum(h, 0.0)
    return h.reshape(N, C, H, W)


def feat_cae_fused_ref(x_nchw, kernel_params):
    """Reference using the exact fused / bf16 numerics of the kernel."""
    N, C, H, W = x_nchw.shape
    h = x_nchw.reshape(N, C, H * W)
    (w1, b1, w2, b2, w34, b34, w5, b5, w6, b6) = kernel_params

    def layer(w, b, h, relu):
        y = jnp.einsum('oc,ncp->nop', w, h.astype(w.dtype),
                       preferred_element_type=jnp.float32) + b[None]
        return jnp.maximum(y, 0.0) if relu else y

    h = layer(w1, b1, h, True)
    h = layer(w2, b2, h, True)
    h = layer(w34, b34, h, True)
    h = layer(w5, b5, h, True)
    h = layer(w6, b6, h, False)
    return h.reshape(N, C, H, W).astype(x_nchw.dtype)


# ----------------------------------------------------------------------------
# Demo / self-check
# ----------------------------------------------------------------------------
if __name__ == "__main__":
    # in_channels=64, latent_dim=8 -> channel chain 64->40->16->(8)->16->40->64
    in_channels, latent_dim = 64, 8
    key = jax.random.PRNGKey(0)
    k_x1, k_x2, k_p = jax.random.split(key, 3)

    raw_params = init_params(k_p, in_channels, latent_dim)
    kernel_params = prepare_kernel_params(raw_params)

    fwd = jax.jit(feat_cae_forward)

    # Case 1: regular feature map (pixel-tiled, t_n = 1 path).
    x1 = jax.random.normal(k_x1, (2, in_channels, 16, 16), jnp.float32)
    out1 = jax.block_until_ready(fwd(x1, kernel_params))
    assert out1.shape == x1.shape and out1.dtype == x1.dtype
    # Tight check vs a pure-JAX reference with identical fused/bf16 numerics.
    assert jnp.allclose(out1, feat_cae_fused_ref(x1, kernel_params),
                        atol=2e-3, rtol=2e-3)
    # Loose check vs the original (unfused, f32, eval-mode BN) module semantics.
    assert jnp.allclose(out1, feat_cae_ref(x1, raw_params), atol=5e-2, rtol=5e-2)

    # Case 2: small feature map, bigger batch (exercises batch packing t_n > 1).
    x2 = jax.random.normal(k_x2, (8, in_channels, 8, 8), jnp.float32)
    out2 = jax.block_until_ready(fwd(x2, kernel_params))
    assert out2.shape == x2.shape and out2.dtype == x2.dtype
    assert jnp.allclose(out2, feat_cae_fused_ref(x2, kernel_params),
                        atol=2e-3, rtol=2e-3)
    assert jnp.allclose(out2, feat_cae_ref(x2, raw_params), atol=5e-2, rtol=5e-2)

    print("KERNEL_OK")
</pallas_src>

<mosaic_0001>
module attributes {stable_mosaic.version = 11 : i64} {
  func.func @_cae_kernel(%arg0: i32, %arg1: i32, %arg2: memref<1x64x256xf32, #tpu.memory_space<vmem>>, %arg3: memref<40x64xbf16, #tpu.memory_space<vmem>>, %arg4: memref<40x1xf32, #tpu.memory_space<vmem>>, %arg5: memref<16x40xbf16, #tpu.memory_space<vmem>>, %arg6: memref<16x1xf32, #tpu.memory_space<vmem>>, %arg7: memref<16x16xbf16, #tpu.memory_space<vmem>>, %arg8: memref<16x1xf32, #tpu.memory_space<vmem>>, %arg9: memref<40x16xbf16, #tpu.memory_space<vmem>>, %arg10: memref<40x1xf32, #tpu.memory_space<vmem>>, %arg11: memref<64x40xbf16, #tpu.memory_space<vmem>>, %arg12: memref<64x1xf32, #tpu.memory_space<vmem>>, %arg13: memref<1x64x256xf32, #tpu.memory_space<vmem>>) attributes {dimension_semantics = [#tpu.dimension_semantics<parallel>, #tpu.dimension_semantics<parallel>], iteration_bounds = array<i64: 2, 1>, scalar_prefetch = 0 : i64, scratch_operands = 0 : i64, tpu.core_type = #tpu.core_type<tc>, window_params = [{transform_indices = @transform_0, window_bounds = array<i64: 1, 64, 256>}, {pipeline_mode = #tpu.pipeline_mode<synchronous>, transform_indices = @transform_1, window_bounds = array<i64: 40, 64>}, {pipeline_mode = #tpu.pipeline_mode<synchronous>, transform_indices = @transform_2, window_bounds = array<i64: 40, 1>}, {pipeline_mode = #tpu.pipeline_mode<synchronous>, transform_indices = @transform_3, window_bounds = array<i64: 16, 40>}, {pipeline_mode = #tpu.pipeline_mode<synchronous>, transform_indices = @transform_4, window_bounds = array<i64: 16, 1>}, {pipeline_mode = #tpu.pipeline_mode<synchronous>, transform_indices = @transform_5, window_bounds = array<i64: 16, 16>}, {pipeline_mode = #tpu.pipeline_mode<synchronous>, transform_indices = @transform_6, window_bounds = array<i64: 16, 1>}, {pipeline_mode = #tpu.pipeline_mode<synchronous>, transform_indices = @transform_7, window_bounds = array<i64: 40, 16>}, {pipeline_mode = #tpu.pipeline_mode<synchronous>, transform_indices = @transform_8, window_bounds = array<i64: 40, 1>}, {pipeline_mode = #tpu.pipeline_mode<synchronous>, transform_indices = @transform_9, window_bounds = array<i64: 64, 40>}, {pipeline_mode = #tpu.pipeline_mode<synchronous>, transform_indices = @transform_10, window_bounds = array<i64: 64, 1>}, {transform_indices = @transform_11, window_bounds = array<i64: 1, 64, 256>}]} {
    %c0 = arith.constant 0 : index
    %c0_0 = arith.constant 0 : index
    %0 = vector.load %arg3[%c0, %c0_0] : memref<40x64xbf16, #tpu.memory_space<vmem>>, vector<40x64xbf16>
    %c0_1 = arith.constant 0 : index
    %c0_2 = arith.constant 0 : index
    %1 = vector.load %arg4[%c0_1, %c0_2] : memref<40x1xf32, #tpu.memory_space<vmem>>, vector<40x1xf32>
    %c0_3 = arith.constant 0 : index
    %c0_4 = arith.constant 0 : index
    %2 = vector.load %arg5[%c0_3, %c0_4] : memref<16x40xbf16, #tpu.memory_space<vmem>>, vector<16x40xbf16>
    %c0_5 = arith.constant 0 : index
    %c0_6 = arith.constant 0 : index
    %3 = vector.load %arg6[%c0_5, %c0_6] : memref<16x1xf32, #tpu.memory_space<vmem>>, vector<16x1xf32>
    %c0_7 = arith.constant 0 : index
    %c0_8 = arith.constant 0 : index
    %4 = vector.load %arg7[%c0_7, %c0_8] : memref<16x16xbf16, #tpu.memory_space<vmem>>, vector<16x16xbf16>
    %c0_9 = arith.constant 0 : index
    %c0_10 = arith.constant 0 : index
    %5 = vector.load %arg8[%c0_9, %c0_10] : memref<16x1xf32, #tpu.memory_space<vmem>>, vector<16x1xf32>
    %c0_11 = arith.constant 0 : index
    %c0_12 = arith.constant 0 : index
    %6 = vector.load %arg9[%c0_11, %c0_12] : memref<40x16xbf16, #tpu.memory_space<vmem>>, vector<40x16xbf16>
    %c0_13 = arith.constant 0 : index
    %c0_14 = arith.constant 0 : index
    %7 = vector.load %arg10[%c0_13, %c0_14] : memref<40x1xf32, #tpu.memory_space<vmem>>, vector<40x1xf32>
    %c0_15 = arith.constant 0 : index
    %c0_16 = arith.constant 0 : index
    %8 = vector.load %arg11[%c0_15, %c0_16] : memref<64x40xbf16, #tpu.memory_space<vmem>>, vector<64x40xbf16>
    %c0_17 = arith.constant 0 : index
    %c0_18 = arith.constant 0 : index
    %9 = vector.load %arg12[%c0_17, %c0_18] : memref<64x1xf32, #tpu.memory_space<vmem>>, vector<64x1xf32>
    %c0_19 = arith.constant 0 : index
    %c0_20 = arith.constant 0 : index
    %c0_21 = arith.constant 0 : index
    %10 = vector.load %arg2[%c0_19, %c0_20, %c0_21] : memref<1x64x256xf32, #tpu.memory_space<vmem>>, vector<1x64x256xf32>
    %11 = vector.shape_cast %10 : vector<1x64x256xf32> to vector<64x256xf32>
    %12 = arith.truncf %11 : vector<64x256xf32> to vector<64x256xbf16>
    %cst = arith.constant dense<0.000000e+00> : vector<40x256xf32>
    %13 = tpu.matmul %0, %12, %cst {dimension_numbers = #tpu.dot_dimension_numbers<[1], [0], [0], [1], [0, 0, 1, 1], [], []>} : vector<40x64xbf16>, vector<64x256xbf16>, vector<40x256xf32> -> vector<40x256xf32>
    %14 = vector.broadcast %1 : vector<40x1xf32> to vector<40x256xf32>
    %15 = arith.addf %13, %14 : vector<40x256xf32>
    %cst_22 = arith.constant 0.000000e+00 : f32
    %16 = vector.broadcast %cst_22 : f32 to vector<40x256xf32>
    %17 = arith.maximumf %15, %16 : vector<40x256xf32>
    %18 = arith.truncf %17 : vector<40x256xf32> to vector<40x256xbf16>
    %cst_23 = arith.constant dense<0.000000e+00> : vector<16x256xf32>
    %19 = tpu.matmul %2, %18, %cst_23 {dimension_numbers = #tpu.dot_dimension_numbers<[1], [0], [0], [1], [0, 0, 1, 1], [], []>} : vector<16x40xbf16>, vector<40x256xbf16>, vector<16x256xf32> -> vector<16x256xf32>
    %20 = vector.broadcast %3 : vector<16x1xf32> to vector<16x256xf32>
    %21 = arith.addf %19, %20 : vector<16x256xf32>
    %cst_24 = arith.constant 0.000000e+00 : f32
    %22 = vector.broadcast %cst_24 : f32 to vector<16x256xf32>
    %23 = arith.maximumf %21, %22 : vector<16x256xf32>
    %24 = arith.truncf %23 : vector<16x256xf32> to vector<16x256xbf16>
    %cst_25 = arith.constant dense<0.000000e+00> : vector<16x256xf32>
    %25 = tpu.matmul %4, %24, %cst_25 {dimension_numbers = #tpu.dot_dimension_numbers<[1], [0], [0], [1], [0, 0, 1, 1], [], []>} : vector<16x16xbf16>, vector<16x256xbf16>, vector<16x256xf32> -> vector<16x256xf32>
    %26 = vector.broadcast %5 : vector<16x1xf32> to vector<16x256xf32>
    %27 = arith.addf %25, %26 : vector<16x256xf32>
    %cst_26 = arith.constant 0.000000e+00 : f32
    %28 = vector.broadcast %cst_26 : f32 to vector<16x256xf32>
    %29 = arith.maximumf %27, %28 : vector<16x256xf32>
    %30 = arith.truncf %29 : vector<16x256xf32> to vector<16x256xbf16>
    %cst_27 = arith.constant dense<0.000000e+00> : vector<40x256xf32>
    %31 = tpu.matmul %6, %30, %cst_27 {dimension_numbers = #tpu.dot_dimension_numbers<[1], [0], [0], [1], [0, 0, 1, 1], [], []>} : vector<40x16xbf16>, vector<16x256xbf16>, vector<40x256xf32> -> vector<40x256xf32>
    %32 = vector.broadcast %7 : vector<40x1xf32> to vector<40x256xf32>
    %33 = arith.addf %31, %32 : vector<40x256xf32>
    %cst_28 = arith.constant 0.000000e+00 : f32
    %34 = vector.broadcast %cst_28 : f32 to vector<40x256xf32>
    %35 = arith.maximumf %33, %34 : vector<40x256xf32>
    %36 = arith.truncf %35 : vector<40x256xf32> to vector<40x256xbf16>
    %cst_29 = arith.constant dense<0.000000e+00> : vector<64x256xf32>
    %37 = tpu.matmul %8, %36, %cst_29 {dimension_numbers = #tpu.dot_dimension_numbers<[1], [0], [0], [1], [0, 0, 1, 1], [], []>} : vector<64x40xbf16>, vector<40x256xbf16>, vector<64x256xf32> -> vector<64x256xf32>
    %38 = vector.broadcast %9 : vector<64x1xf32> to vector<64x256xf32>
    %39 = arith.addf %37, %38 : vector<64x256xf32>
    %c0_30 = arith.constant 0 : index
    %c0_31 = arith.constant 0 : index
    %c0_32 = arith.constant 0 : index
    %40 = vector.load %arg13[%c0_30, %c0_31, %c0_32] : memref<1x64x256xf32, #tpu.memory_space<vmem>>, vector<1x64x256xf32>
    %41 = vector.shape_cast %40 : vector<1x64x256xf32> to vector<64x256xf32>
    %42 = vector.shape_cast %39 : vector<64x256xf32> to vector<1x64x256xf32>
    tpu.vector_store %arg13[%c0_30, %c0_31, %c0_32], %42 {strides = array<i32>} : memref<1x64x256xf32, #tpu.memory_space<vmem>>, vector<1x64x256xf32>,
    return
  }
  func.func @transform_0(%arg0: i32, %arg1: i32) -> (i32, i32, i32) {
    %c0_i32 = arith.constant 0 : i32
    %c0_i32_0 = arith.constant 0 : i32
    return %arg0, %c0_i32, %arg1 : i32, i32, i32
  }
  func.func @transform_1(%arg0: i32, %arg1: i32) -> (i32, i32) {
    %c0_i32 = arith.constant 0 : i32
    %c0_i32_0 = arith.constant 0 : i32
    %c0_i32_1 = arith.constant 0 : i32
    return %c0_i32, %c0_i32_0 : i32, i32
  }
  func.func @transform_2(%arg0: i32, %arg1: i32) -> (i32, i32) {
    %c0_i32 = arith.constant 0 : i32
    %c0_i32_0 = arith.constant 0 : i32
    %c0_i32_1 = arith.constant 0 : i32
    return %c0_i32, %c0_i32_0 : i32, i32
  }
  func.func @transform_3(%arg0: i32, %arg1: i32) -> (i32, i32) {
    %c0_i32 = arith.constant 0 : i32
    %c0_i32_0 = arith.constant 0 : i32
    %c0_i32_1 = arith.constant 0 : i32
    return %c0_i32, %c0_i32_0 : i32, i32
  }
  func.func @transform_4(%arg0: i32, %arg1: i32) -> (i32, i32) {
    %c0_i32 = arith.constant 0 : i32
    %c0_i32_0 = arith.constant 0 : i32
    %c0_i32_1 = arith.constant 0 : i32
    return %c0_i32, %c0_i32_0 : i32, i32
  }
  func.func @transform_5(%arg0: i32, %arg1: i32) -> (i32, i32) {
    %c0_i32 = arith.constant 0 : i32
    %c0_i32_0 = arith.constant 0 : i32
    %c0_i32_1 = arith.constant 0 : i32
    return %c0_i32, %c0_i32_0 : i32, i32
  }
  func.func @transform_6(%arg0: i32, %arg1: i32) -> (i32, i32) {
    %c0_i32 = arith.constant 0 : i32
    %c0_i32_0 = arith.constant 0 : i32
    %c0_i32_1 = arith.constant 0 : i32
    return %c0_i32, %c0_i32_0 : i32, i32
  }
  func.func @transform_7(%arg0: i32, %arg1: i32) -> (i32, i32) {
    %c0_i32 = arith.constant 0 : i32
    %c0_i32_0 = arith.constant 0 : i32
    %c0_i32_1 = arith.constant 0 : i32
    return %c0_i32, %c0_i32_0 : i32, i32
  }
  func.func @transform_8(%arg0: i32, %arg1: i32) -> (i32, i32) {
    %c0_i32 = arith.constant 0 : i32
    %c0_i32_0 = arith.constant 0 : i32
    %c0_i32_1 = arith.constant 0 : i32
    return %c0_i32, %c0_i32_0 : i32, i32
  }
  func.func @transform_9(%arg0: i32, %arg1: i32) -> (i32, i32) {
    %c0_i32 = arith.constant 0 : i32
    %c0_i32_0 = arith.constant 0 : i32
    %c0_i32_1 = arith.constant 0 : i32
    return %c0_i32, %c0_i32_0 : i32, i32
  }
  func.func @transform_10(%arg0: i32, %arg1: i32) -> (i32, i32) {
    %c0_i32 = arith.constant 0 : i32
    %c0_i32_0 = arith.constant 0 : i32
    %c0_i32_1 = arith.constant 0 : i32
    return %c0_i32, %c0_i32_0 : i32, i32
  }
  func.func @transform_11(%arg0: i32, %arg1: i32) -> (i32, i32, i32) {
    %c0_i32 = arith.constant 0 : i32
    %c0_i32_0 = arith.constant 0 : i32
    return %arg0, %c0_i32, %arg1 : i32, i32, i32
  }
}

</mosaic_0001>

<llo_original>
// kernel: feat_cae_forward.1
$region0: #{feat_cae_forward.1}
  #allocation0 [shape = 'u32[]', space=smem, size = 0x4, offset = 0x4, fixed_abs, tag = 'smem constant byte address 0x4 - core index']
  #allocation1 [shape = 'u32[144,128]{1,0:T(1,128)}', space=vmem, size = 0x12000, scoped, tag = 'internal scratch']
  %s0 = inlined_call_operand.vmem [shape: f32[2,64,256], index: 0, kind: input, shape index: {}]
  %s1 = inlined_call_operand.vmem [shape: bf16[40,64], index: 1, kind: input, shape index: {}]
  %s2 = inlined_call_operand.vmem [shape: f32[40,1], index: 2, kind: input, shape index: {}]
  %s3 = inlined_call_operand.vmem [shape: bf16[16,40], index: 3, kind: input, shape index: {}]
  %s4 = inlined_call_operand.vmem [shape: f32[16,1], index: 4, kind: input, shape index: {}]
  %s5 = inlined_call_operand.vmem [shape: bf16[16,16], index: 5, kind: input, shape index: {}]
  %s6 = inlined_call_operand.vmem [shape: f32[16,1], index: 6, kind: input, shape index: {}]
  %s7 = inlined_call_operand.vmem [shape: bf16[40,16], index: 7, kind: input, shape index: {}]
  %s8 = inlined_call_operand.vmem [shape: f32[40,1], index: 8, kind: input, shape index: {}]
  %s9 = inlined_call_operand.vmem [shape: bf16[64,40], index: 9, kind: input, shape index: {}]
  %s10 = inlined_call_operand.vmem [shape: f32[64,1], index: 10, kind: input, shape index: {}]
  %s11 = inlined_call_operand.vmem [shape: f32[2,64,256], index: 11, kind: output, shape index: {}]
  %s12 = sld [smem:[#allocation0]]
  $region77: #{feat_cae_forward.1} parent=0
    _
  %s14 = ssub.s32 1, %s12
  %s15 = scalar_select 0, %s14, %s12
  loop: start=0, step=1, limit=4
  $region2: #{feat_cae_forward.1} parent=0 // loop_pre_header
    _
  $region3: #{feat_cae_forward.1} parent=0 // loop_header
    %s17 = sphi 0, %s21
    %p18 = scmp.ge.s32.totalorder %s17, 4
    %s24 = sphi 0, %s36
    %s25 = sphi 0, %s32
    %s26 = sphi 0, %s24
    %s27 = sphi 0, %s25
    %s28 = sphi 0, %s26
    %s29 = sphi 0, %s27
    %s41 = sphi 0, %s43
    %s44 = sphi 0, %s41
    %s45 = sphi 0, %s44
    %s61 = sphi 0, %s45
    %s65 = sphi 0, %s65
    %s67 = sphi 0, %s65
    %s68 = sphi 0, %s67
    %s82 = sphi 0, %s68
    %s86 = sphi 0, %s86
    %s88 = sphi 0, %s86
    %s89 = sphi 0, %s88
    %s103 = sphi 0, %s89
    %s107 = sphi 0, %s107
    %s109 = sphi 0, %s107
    %s110 = sphi 0, %s109
    %s124 = sphi 0, %s110
    %s128 = sphi 0, %s128
    %s130 = sphi 0, %s128
    %s131 = sphi 0, %s130
    %s145 = sphi 0, %s131
    %s149 = sphi 0, %s149
    %s151 = sphi 0, %s149
    %s152 = sphi 0, %s151
    %s166 = sphi 0, %s152
    %s170 = sphi 0, %s170
    %s172 = sphi 0, %s170
    %s173 = sphi 0, %s172
    %s187 = sphi 0, %s173
    %s191 = sphi 0, %s191
    %s193 = sphi 0, %s191
    %s194 = sphi 0, %s193
    %s208 = sphi 0, %s194
    %s212 = sphi 0, %s212
    %s214 = sphi 0, %s212
    %s215 = sphi 0, %s214
    %s229 = sphi 0, %s215
    %s233 = sphi 0, %s233
    %s235 = sphi 0, %s233
    %s236 = sphi 0, %s235
    %s250 = sphi 0, %s236
    %s254 = sphi 0, %s254
    %s256 = sphi 0, %s254
    %s257 = sphi 0, %s256
    %s271 = sphi 0, %s257
    %s279 = sphi 0, %s281
    %s282 = sphi 0, %s279
    %s283 = sphi 0, %s282
    %s299 = sphi 0, %s283
  $region4: #{feat_cae_forward.1} parent=0 // loop_header_branch
    %20 = sbr.rel (%p18) target = $region8
  $region5: #{feat_cae_forward.1} parent=0 // loop_body
    %s22 = ssub.s32 %s17, 1
    %s23 = ssub.s32 %s17, 2
    %s30 = sadd.s32 1, %s25
    %p31 = scmp.ge.s32.totalorder %s30, 1
    %s32 = scalar_select %p31, 0, %s30
    %s33 = sadd.s32 1, %s24
    %s34 = scalar_select %p31, %s33, %s24
    %p35 = scmp.ge.s32.totalorder %s34, 2
    %s36 = scalar_select %p35, 0, %s34
    %s37 = ssub.s32 %s24, %s36
    %s38 = ssub.s32 %s25, %s32
    %s39 = sor.u32 %s37, %s38
    %p40 = scmp.eq.s32.totalorder %s39, 0
    %s42 = sadd.s32 %s41, 1
    %s43 = scalar_select %p40, %s41, %s42
    %p46 = pneg %p40
    %p47 = scmp.eq.s32.totalorder %s17, 1
    %p48 = por %p46, %p47
    %p49 = scmp.ne.s32.totalorder %s41, %s44
    %p50 = scmp.eq.s32.totalorder %s17, 0
    %p51 = por %p49, %p50
    %p52 = scmp.ne.s32.totalorder %s41, %s44
    %p53 = scmp.eq.s32.totalorder %s22, 1
    %p54 = por %p52, %p53
    %p55 = scmp.ne.s32.totalorder %s44, %s45
    %p56 = scmp.eq.s32.totalorder %s22, 0
    %p57 = por %p55, %p56
    %p58 = scmp.ne.s32.totalorder %s44, %s45
    %p59 = scmp.eq.s32.totalorder %s23, 1
    %p60 = por %p58, %p59
    %p62 = scmp.ne.s32.totalorder %s45, %s61
    %p63 = scmp.eq.s32.totalorder %s23, 0
    %p64 = por %p62, %p63
    %s66 = sadd.s32 %s65, 1
    %p69 = scmp.eq.s32.totalorder %s17, 1
    %p70 = scmp.ne.s32.totalorder %s65, %s67
    %p71 = scmp.eq.s32.totalorder %s17, 0
    %p72 = por %p70, %p71
    %p73 = scmp.ne.s32.totalorder %s65, %s67
    %p74 = scmp.eq.s32.totalorder %s22, 1
    %p75 = por %p73, %p74
    %p76 = scmp.ne.s32.totalorder %s67, %s68
    %p77 = scmp.eq.s32.totalorder %s22, 0
    %p78 = por %p76, %p77
    %p79 = scmp.ne.s32.totalorder %s67, %s68
    %p80 = scmp.eq.s32.totalorder %s23, 1
    %p81 = por %p79, %p80
    %p83 = scmp.ne.s32.totalorder %s68, %s82
    %p84 = scmp.eq.s32.totalorder %s23, 0
    %p85 = por %p83, %p84
    %s87 = sadd.s32 %s86, 1
    %p90 = scmp.eq.s32.totalorder %s17, 1
    %p91 = scmp.ne.s32.totalorder %s86, %s88
    %p92 = scmp.eq.s32.totalorder %s17, 0
    %p93 = por %p91, %p92
    %p94 = scmp.ne.s32.totalorder %s86, %s88
    %p95 = scmp.eq.s32.totalorder %s22, 1
    %p96 = por %p94, %p95
    %p97 = scmp.ne.s32.totalorder %s88, %s89
    %p98 = scmp.eq.s32.totalorder %s22, 0
    %p99 = por %p97, %p98
    %p100 = scmp.ne.s32.totalorder %s88, %s89
    %p101 = scmp.eq.s32.totalorder %s23, 1
    %p102 = por %p100, %p101
    %p104 = scmp.ne.s32.totalorder %s89, %s103
    %p105 = scmp.eq.s32.totalorder %s23, 0
    %p106 = por %p104, %p105
    %s108 = sadd.s32 %s107, 1
    %p111 = scmp.eq.s32.totalorder %s17, 1
    %p112 = scmp.ne.s32.totalorder %s107, %s109
    %p113 = scmp.eq.s32.totalorder %s17, 0
    %p114 = por %p112, %p113
    %p115 = scmp.ne.s32.totalorder %s107, %s109
    %p116 = scmp.eq.s32.totalorder %s22, 1
    %p117 = por %p115, %p116
    %p118 = scmp.ne.s32.totalorder %s109, %s110
    %p119 = scmp.eq.s32.totalorder %s22, 0
    %p120 = por %p118, %p119
    %p121 = scmp.ne.s32.totalorder %s109, %s110
    %p122 = scmp.eq.s32.totalorder %s23, 1
    %p123 = por %p121, %p122
    %p125 = scmp.ne.s32.totalorder %s110, %s124
    %p126 = scmp.eq.s32.totalorder %s23, 0
    %p127 = por %p125, %p126
    %s129 = sadd.s32 %s128, 1
    %p132 = scmp.eq.s32.totalorder %s17, 1
    %p133 = scmp.ne.s32.totalorder %s128, %s130
    %p134 = scmp.eq.s32.totalorder %s17, 0
    %p135 = por %p133, %p134
    %p136 = scmp.ne.s32.totalorder %s128, %s130
    %p137 = scmp.eq.s32.totalorder %s22, 1
    %p138 = por %p136, %p137
    %p139 = scmp.ne.s32.totalorder %s130, %s131
    %p140 = scmp.eq.s32.totalorder %s22, 0
    %p141 = por %p139, %p140
    %p142 = scmp.ne.s32.totalorder %s130, %s131
    %p143 = scmp.eq.s32.totalorder %s23, 1
    %p144 = por %p142, %p143
    %p146 = scmp.ne.s32.totalorder %s131, %s145
    %p147 = scmp.eq.s32.totalorder %s23, 0
    %p148 = por %p146, %p147
    %s150 = sadd.s32 %s149, 1
    %p153 = scmp.eq.s32.totalorder %s17, 1
    %p154 = scmp.ne.s32.totalorder %s149, %s151
    %p155 = scmp.eq.s32.totalorder %s17, 0
    %p156 = por %p154, %p155
    %p157 = scmp.ne.s32.totalorder %s149, %s151
    %p158 = scmp.eq.s32.totalorder %s22, 1
    %p159 = por %p157, %p158
    %p160 = scmp.ne.s32.totalorder %s151, %s152
    %p161 = scmp.eq.s32.totalorder %s22, 0
    %p162 = por %p160, %p161
    %p163 = scmp.ne.s32.totalorder %s151, %s152
    %p164 = scmp.eq.s32.totalorder %s23, 1
    %p165 = por %p163, %p164
    %p167 = scmp.ne.s32.totalorder %s152, %s166
    %p168 = scmp.eq.s32.totalorder %s23, 0
    %p169 = por %p167, %p168
    %s171 = sadd.s32 %s170, 1
    %p174 = scmp.eq.s32.totalorder %s17, 1
    %p175 = scmp.ne.s32.totalorder %s170, %s172
    %p176 = scmp.eq.s32.totalorder %s17, 0
    %p177 = por %p175, %p176
    %p178 = scmp.ne.s32.totalorder %s170, %s172
    %p179 = scmp.eq.s32.totalorder %s22, 1
    %p180 = por %p178, %p179
    %p181 = scmp.ne.s32.totalorder %s172, %s173
    %p182 = scmp.eq.s32.totalorder %s22, 0
    %p183 = por %p181, %p182
    %p184 = scmp.ne.s32.totalorder %s172, %s173
    %p185 = scmp.eq.s32.totalorder %s23, 1
    %p186 = por %p184, %p185
    %p188 = scmp.ne.s32.totalorder %s173, %s187
    %p189 = scmp.eq.s32.totalorder %s23, 0
    %p190 = por %p188, %p189
    %s192 = sadd.s32 %s191, 1
    %p195 = scmp.eq.s32.totalorder %s17, 1
    %p196 = scmp.ne.s32.totalorder %s191, %s193
    %p197 = scmp.eq.s32.totalorder %s17, 0
    %p198 = por %p196, %p197
    %p199 = scmp.ne.s32.totalorder %s191, %s193
    %p200 = scmp.eq.s32.totalorder %s22, 1
    %p201 = por %p199, %p200
    %p202 = scmp.ne.s32.totalorder %s193, %s194
    %p203 = scmp.eq.s32.totalorder %s22, 0
    %p204 = por %p202, %p203
    %p205 = scmp.ne.s32.totalorder %s193, %s194
    %p206 = scmp.eq.s32.totalorder %s23, 1
    %p207 = por %p205, %p206
    %p209 = scmp.ne.s32.totalorder %s194, %s208
    %p210 = scmp.eq.s32.totalorder %s23, 0
    %p211 = por %p209, %p210
    %s213 = sadd.s32 %s212, 1
    %p216 = scmp.eq.s32.totalorder %s17, 1
    %p217 = scmp.ne.s32.totalorder %s212, %s214
    %p218 = scmp.eq.s32.totalorder %s17, 0
    %p219 = por %p217, %p218
    %p220 = scmp.ne.s32.totalorder %s212, %s214
    %p221 = scmp.eq.s32.totalorder %s22, 1
    %p222 = por %p220, %p221
    %p223 = scmp.ne.s32.totalorder %s214, %s215
    %p224 = scmp.eq.s32.totalorder %s22, 0
    %p225 = por %p223, %p224
    %p226 = scmp.ne.s32.totalorder %s214, %s215
    %p227 = scmp.eq.s32.totalorder %s23, 1
    %p228 = por %p226, %p227
    %p230 = scmp.ne.s32.totalorder %s215, %s229
    %p231 = scmp.eq.s32.totalorder %s23, 0
    %p232 = por %p230, %p231
    %s234 = sadd.s32 %s233, 1
    %p237 = scmp.eq.s32.totalorder %s17, 1
    %p238 = scmp.ne.s32.totalorder %s233, %s235
    %p239 = scmp.eq.s32.totalorder %s17, 0
    %p240 = por %p238, %p239
    %p241 = scmp.ne.s32.totalorder %s233, %s235
    %p242 = scmp.eq.s32.totalorder %s22, 1
    %p243 = por %p241, %p242
    %p244 = scmp.ne.s32.totalorder %s235, %s236
    %p245 = scmp.eq.s32.totalorder %s22, 0
    %p246 = por %p244, %p245
    %p247 = scmp.ne.s32.totalorder %s235, %s236
    %p248 = scmp.eq.s32.totalorder %s23, 1
    %p249 = por %p247, %p248
    %p251 = scmp.ne.s32.totalorder %s236, %s250
    %p252 = scmp.eq.s32.totalorder %s23, 0
    %p253 = por %p251, %p252
    %s255 = sadd.s32 %s254, 1
    %p258 = scmp.eq.s32.totalorder %s17, 1
    %p259 = scmp.ne.s32.totalorder %s254, %s256
    %p260 = scmp.eq.s32.totalorder %s17, 0
    %p261 = por %p259, %p260
    %p262 = scmp.ne.s32.totalorder %s254, %s256
    %p263 = scmp.eq.s32.totalorder %s22, 1
    %p264 = por %p262, %p263
    %p265 = scmp.ne.s32.totalorder %s256, %s257
    %p266 = scmp.eq.s32.totalorder %s22, 0
    %p267 = por %p265, %p266
    %p268 = scmp.ne.s32.totalorder %s256, %s257
    %p269 = scmp.eq.s32.totalorder %s23, 1
    %p270 = por %p268, %p269
    %p272 = scmp.ne.s32.totalorder %s257, %s271
    %p273 = scmp.eq.s32.totalorder %s23, 0
    %p274 = por %p272, %p273
    %s275 = ssub.s32 %s24, %s36
    %s276 = ssub.s32 %s25, %s32
    %s277 = sor.u32 %s275, %s276
    %p278 = scmp.eq.s32.totalorder %s277, 0
    %s280 = sadd.s32 %s279, 1
    %s281 = scalar_select %p278, %s279, %s280
    %p284 = pneg %p278
    %p285 = scmp.eq.s32.totalorder %s17, 1
    %p286 = por %p284, %p285
    %p287 = scmp.ne.s32.totalorder %s279, %s282
    %p288 = scmp.eq.s32.totalorder %s17, 0
    %p289 = por %p287, %p288
    %p290 = scmp.ne.s32.totalorder %s279, %s282
    %p291 = scmp.eq.s32.totalorder %s22, 1
    %p292 = por %p290, %p291
    %p293 = scmp.ne.s32.totalorder %s282, %s283
    %p294 = scmp.eq.s32.totalorder %s22, 0
    %p295 = por %p293, %p294
    %p296 = scmp.ne.s32.totalorder %s282, %s283
    %p297 = scmp.eq.s32.totalorder %s23, 1
    %p298 = por %p296, %p297
    %p300 = scmp.ne.s32.totalorder %s283, %s299
    %p301 = scmp.eq.s32.totalorder %s23, 0
    %p302 = por %p300, %p301
    %p303 = scmp.le.s32.totalorder 1, %s17
    %p304 = scmp.lt.s32.totalorder %s17, 3
    %p305 = pnand %p303, %p304
    %p306 = pneg %p305
    // Predicated region
    $region9: #{feat_cae_forward.1} parent=5 // pred_check
      _
    $region10: #{feat_cae_forward.1} parent=5 // pred_check_branch
      %308 = sbr.rel (%p305) target = $region12
    $region11: #{feat_cae_forward.1} parent=5 // pred_region
      %s309 = ssub.s32 %s17, 1
      // Predicated region
      $region13: #{feat_cae_forward.1} parent=11 // pred_check
        %p310 = pneg %p78
      $region14: #{feat_cae_forward.1} parent=11 // pred_check_branch
        %312 = sbr.rel (%p310) target = $region16
      $region15: #{feat_cae_forward.1} parent=11 // pred_region
        _
      $region16: #{feat_cae_forward.1} parent=11 // pred_fallthru
        _
      // Predicated region
      $region17: #{feat_cae_forward.1} parent=11 // pred_check
        %p313 = pneg %p99
      $region18: #{feat_cae_forward.1} parent=11 // pred_check_branch
        %315 = sbr.rel (%p313) target = $region20
      $region19: #{feat_cae_forward.1} parent=11 // pred_region
        _
      $region20: #{feat_cae_forward.1} parent=11 // pred_fallthru
        _
      // Predicated region
      $region21: #{feat_cae_forward.1} parent=11 // pred_check
        %p316 = pneg %p120
      $region22: #{feat_cae_forward.1} parent=11 // pred_check_branch
        %318 = sbr.rel (%p316) target = $region24
      $region23: #{feat_cae_forward.1} parent=11 // pred_region
        _
      $region24: #{feat_cae_forward.1} parent=11 // pred_fallthru
        _
      // Predicated region
      $region25: #{feat_cae_forward.1} parent=11 // pred_check
        %p319 = pneg %p141
      $region26: #{feat_cae_forward.1} parent=11 // pred_check_branch
        %321 = sbr.rel (%p319) target = $region28
      $region27: #{feat_cae_forward.1} parent=11 // pred_region
        _
      $region28: #{feat_cae_forward.1} parent=11 // pred_fallthru
        _
      // Predicated region
      $region29: #{feat_cae_forward.1} parent=11 // pred_check
        %p322 = pneg %p162
      $region30: #{feat_cae_forward.1} parent=11 // pred_check_branch
        %324 = sbr.rel (%p322) target = $region32
      $region31: #{feat_cae_forward.1} parent=11 // pred_region
        _
      $region32: #{feat_cae_forward.1} parent=11 // pred_fallthru
        _
      // Predicated region
      $region33: #{feat_cae_forward.1} parent=11 // pred_check
        %p325 = pneg %p183
      $region34: #{feat_cae_forward.1} parent=11 // pred_check_branch
        %327 = sbr.rel (%p325) target = $region36
      $region35: #{feat_cae_forward.1} parent=11 // pred_region
        _
      $region36: #{feat_cae_forward.1} parent=11 // pred_fallthru
        _
      // Predicated region
      $region37: #{feat_cae_forward.1} parent=11 // pred_check
        %p328 = pneg %p204
      $region38: #{feat_cae_forward.1} parent=11 // pred_check_branch
        %330 = sbr.rel (%p328) target = $region40
      $region39: #{feat_cae_forward.1} parent=11 // pred_region
        _
      $region40: #{feat_cae_forward.1} parent=11 // pred_fallthru
        _
      // Predicated region
      $region41: #{feat_cae_forward.1} parent=11 // pred_check
        %p331 = pneg %p225
      $region42: #{feat_cae_forward.1} parent=11 // pred_check_branch
        %333 = sbr.rel (%p331) target = $region44
      $region43: #{feat_cae_forward.1} parent=11 // pred_region
        _
      $region44: #{feat_cae_forward.1} parent=11 // pred_fallthru
        _
      // Predicated region
      $region45: #{feat_cae_forward.1} parent=11 // pred_check
        %p334 = pneg %p246
      $region46: #{feat_cae_forward.1} parent=11 // pred_check_branch
        %336 = sbr.rel (%p334) target = $region48
      $region47: #{feat_cae_forward.1} parent=11 // pred_region
        _
      $region48: #{feat_cae_forward.1} parent=11 // pred_fallthru
        _
      // Predicated region
      $region49: #{feat_cae_forward.1} parent=11 // pred_check
        %p337 = pneg %p267
      $region50: #{feat_cae_forward.1} parent=11 // pred_check_branch
        %339 = sbr.rel (%p337) target = $region52
      $region51: #{feat_cae_forward.1} parent=11 // pred_region
        _
      $region52: #{feat_cae_forward.1} parent=11 // pred_fallthru
        _
    $region12: #{feat_cae_forward.1} parent=5 // pred_fallthru
      _
    %p340 = scmp.lt.s32.totalorder %s17, 2
    // Predicated region
    $region53: #{feat_cae_forward.1} parent=5 // pred_check
      %p341 = pneg %p340
    $region54: #{feat_cae_forward.1} parent=5 // pred_check_branch
      %343 = sbr.rel (%p341) target = $region56
    $region55: #{feat_cae_forward.1} parent=5 // pred_region
      // Predicated region
      $region57: #{feat_cae_forward.1} parent=55 // pred_check
        %p344 = pneg %p51
      $region58: #{feat_cae_forward.1} parent=55 // pred_check_branch
        %346 = sbr.rel (%p344) target = $region60
      $region59: #{feat_cae_forward.1} parent=55 // pred_region
        %s347 = smul.u32 2, %s25
        %p348 = scmp.lt.s32.totalorder %s24, 1
        %s349 = scalar_select %p348, %s24, 1
        %p350 = scmp.lt.s32.totalorder %s347, 1
        %s351 = scalar_select %p350, %s347, 1
        %s352 = smul.addr %s349, 16
        %s353 = sadd.s32 %s351, %s352
        %s354 = smul.addr %s353, 8
        %s355 = scalar_lea.vmem %s0, %s354
        %s356 = smul.u32 2, %s25
      $region60: #{feat_cae_forward.1} parent=55 // pred_fallthru
        _
    $region56: #{feat_cae_forward.1} parent=5 // pred_fallthru
      _
    %p357 = scmp.le.s32.totalorder 1, %s17
    %p358 = scmp.lt.s32.totalorder %s17, 3
    %p359 = pnand %p357, %p358
    %p360 = pneg %p359
    // Predicated region
    $region61: #{feat_cae_forward.1} parent=5 // pred_check
      _
    $region62: #{feat_cae_forward.1} parent=5 // pred_check_branch
      %362 = sbr.rel (%p359) target = $region64
    $region63: #{feat_cae_forward.1} parent=5 // pred_region
      %s363 = ssub.s32 %s17, 1
      %s364 = smul.u32 2, %s27
      %p365 = scmp.lt.s32.totalorder %s26, 1
      %s366 = scalar_select %p365, %s26, 1
      %p367 = scmp.lt.s32.totalorder %s364, 1
      %s368 = scalar_select %p367, %s364, 1
      %s369 = smul.addr %s366, 16
      %s370 = sadd.s32 %s368, %s369
      %s371 = smul.addr %s370, 8
      %s372 = scalar_lea.vmem %s0, %s371
      %p373 = pneg %p57
      %p374 = pneg %p54
      %p375 = pneg %p78
      %p376 = pneg %p75
      %p377 = pneg %p99
      %p378 = pneg %p96
      %p379 = pneg %p120
      %p380 = pneg %p117
      %p381 = pneg %p141
      %p382 = pneg %p138
      %p383 = pneg %p162
      %p384 = pneg %p159
      %p385 = pneg %p183
      %p386 = pneg %p180
      %p387 = pneg %p204
      %p388 = pneg %p201
      %p389 = pneg %p225
      %p390 = pneg %p222
      %p391 = pneg %p246
      %p392 = pneg %p243
      %p393 = pneg %p267
      %p394 = pneg %p264
      %p395 = pneg %p295
      %p396 = pneg %p292
      %s397 = smul.u32 2, %s27
      %p398 = scmp.lt.s32.totalorder %s26, 1
      %s399 = scalar_select %p398, %s26, 1
      %p400 = scmp.lt.s32.totalorder %s397, 1
      %s401 = scalar_select %p400, %s397, 1
      %s402 = smul.addr %s399, 16
      %s403 = sadd.s32 %s401, %s402
      %s404 = smul.addr %s403, 8
      %s405 = scalar_lea.vmem %s11, %s404
      %s406 = smul.u32 2, %s27
      %p407 = scmp.lt.s32.totalorder %s26, 1
      %s408 = scalar_select %p407, %s26, 1
      %p409 = scmp.lt.s32.totalorder %s406, 1
      %s410 = scalar_select %p409, %s406, 1
      %s411 = smul.addr %s408, 16
      %s412 = sadd.s32 %s410, %s411
      %s413 = smul.addr %s412, 8
      %s414 = scalar_lea.vmem %s0, %s413
      %s415 = smul.u32 2, %s27
      %s416 = smul.u32 2, %s27
      %p417 = scmp.lt.s32.totalorder %s26, 1
      %s418 = scalar_select %p417, %s26, 1
      %p419 = scmp.lt.s32.totalorder %s416, 1
      %s420 = scalar_select %p419, %s416, 1
      %s421 = smul.addr %s418, 16
      %s422 = sadd.s32 %s420, %s421
      %s423 = smul.addr %s422, 8
      %s424 = scalar_lea.vmem %s11, %s423
      %s425 = smul.u32 2, %s27
      %v427 = vld [vmem:[%s1] sm:$0xf]
      %v428 = vld [vmem:[%s1 + $0x4] sm:$0xf]
      %v429 = vld [vmem:[%s1 + $0x8] sm:$0xf]
      %v430 = vld [vmem:[%s1 + $0xc] sm:$0xf]
      %v431 = vld [vmem:[%s1 + $0x10] sm:$0xf]
      %v432 = vld [vmem:[%s2] sm:$0xff]
      %v433 = vld [vmem:[%s2 + $0x8] sm:$0xff]
      %v434 = vld [vmem:[%s2 + $0x10] sm:$0xff]
      %v435 = vld [vmem:[%s2 + $0x18] sm:$0xff]
      %v436 = vld [vmem:[%s2 + $0x20] sm:$0xff]
      %v437 = vld [vmem:[%s3] sm:$0xf]
      %v438 = vld [vmem:[%s3 + $0x4] sm:$0xf]
      %v439 = vld [vmem:[%s4] sm:$0xff]
      %v440 = vld [vmem:[%s4 + $0x8] sm:$0xff]
      %v441 = vld [vmem:[%s5] sm:$0xf]
      %v442 = vld [vmem:[%s5 + $0x4] sm:$0xf]
      %v443 = vld [vmem:[%s6] sm:$0xff]
      %v444 = vld [vmem:[%s6 + $0x8] sm:$0xff]
      %v445 = vld [vmem:[%s7] sm:$0xf]
      %v446 = vld [vmem:[%s7 + $0x4] sm:$0xf]
      %v447 = vld [vmem:[%s7 + $0x8] sm:$0xf]
      %v448 = vld [vmem:[%s7 + $0xc] sm:$0xf]
      %v449 = vld [vmem:[%s7 + $0x10] sm:$0xf]
      %v450 = vld [vmem:[%s8] sm:$0xff]
      %v451 = vld [vmem:[%s8 + $0x8] sm:$0xff]
      %v452 = vld [vmem:[%s8 + $0x10] sm:$0xff]
      %v453 = vld [vmem:[%s8 + $0x18] sm:$0xff]
      %v454 = vld [vmem:[%s8 + $0x20] sm:$0xff]
      %v455 = vld [vmem:[%s9] sm:$0xf]
      %v456 = vld [vmem:[%s9 + $0x4] sm:$0xf]
      %v457 = vld [vmem:[%s9 + $0x8] sm:$0xf]
      %v458 = vld [vmem:[%s9 + $0xc] sm:$0xf]
      %v459 = vld [vmem:[%s9 + $0x10] sm:$0xf]
      %v460 = vld [vmem:[%s9 + $0x14] sm:$0xf]
      %v461 = vld [vmem:[%s9 + $0x18] sm:$0xf]
      %v462 = vld [vmem:[%s9 + $0x1c] sm:$0xf]
      %v463 = vld [vmem:[%s10] sm:$0xff]
      %v464 = vld [vmem:[%s10 + $0x8] sm:$0xff]
      %v465 = vld [vmem:[%s10 + $0x10] sm:$0xff]
      %v466 = vld [vmem:[%s10 + $0x18] sm:$0xff]
      %v467 = vld [vmem:[%s10 + $0x20] sm:$0xff]
      %v468 = vld [vmem:[%s10 + $0x28] sm:$0xff]
      %v469 = vld [vmem:[%s10 + $0x30] sm:$0xff]
      %v470 = vld [vmem:[%s10 + $0x38] sm:$0xff]
      %v471 = vld [vmem:[%s414] sm:$0xff]
      %v472 = vld [vmem:[%s414 + $0x8] sm:$0xff]
      %v473 = vld [vmem:[%s414 + $0x10] sm:$0xff]
      %v474 = vld [vmem:[%s414 + $0x18] sm:$0xff]
      %v475 = vld [vmem:[%s414 + $0x20] sm:$0xff]
      %v476 = vld [vmem:[%s414 + $0x28] sm:$0xff]
      %v477 = vld [vmem:[%s414 + $0x30] sm:$0xff]
      %v478 = vld [vmem:[%s414 + $0x38] sm:$0xff]
      %v479 = vld [vmem:[%s414 + $0x40] sm:$0xff]
      %v480 = vld [vmem:[%s414 + $0x48] sm:$0xff]
      %v481 = vld [vmem:[%s414 + $0x50] sm:$0xff]
      %v482 = vld [vmem:[%s414 + $0x58] sm:$0xff]
      %v483 = vld [vmem:[%s414 + $0x60] sm:$0xff]
      %v484 = vld [vmem:[%s414 + $0x68] sm:$0xff]
      %v485 = vld [vmem:[%s414 + $0x70] sm:$0xff]
      %v486 = vld [vmem:[%s414 + $0x78] sm:$0xff]
      %v487 = vpack.c.bf16 %v473, %v471
      %v488 = vpack.c.bf16 %v474, %v472
      %v489 = vpack.c.bf16 %v477, %v475
      %v490 = vpack.c.bf16 %v478, %v476
      %v491 = vpack.c.bf16 %v481, %v479
      %v492 = vpack.c.bf16 %v482, %v480
      %v493 = vpack.c.bf16 %v485, %v483
      %v494 = vpack.c.bf16 %v486, %v484
      %496 = vset.pattern.permute.xlu0 0
      %497 = vperm.xlu0 %496, %v432
      %v498 = vpop.permute.xlu0 %497
      %501 = vset.pattern.permute.xlu0 0
      %502 = vperm.xlu0 %501, %v433
      %v503 = vpop.permute.xlu0 %502
      %506 = vset.pattern.permute.xlu0 0
      %507 = vperm.xlu0 %506, %v434
      %v508 = vpop.permute.xlu0 %507
      %511 = vset.pattern.permute.xlu0 0
      %512 = vperm.xlu0 %511, %v435
      %v513 = vpop.permute.xlu0 %512
      %516 = vset.pattern.permute.xlu0 0
      %517 = vperm.xlu0 %516, %v436
      %v518 = vpop.permute.xlu0 %517
      %v525 = vunpack.c.l.b16 %v427
      %v526 = vunpack.c.l.b16 %v428
      %v527 = vunpack.c.l.b16 %v429
      %v528 = vunpack.c.l.b16 %v430
      %v529 = vunpack.c.l.b16 %v431
      %v530 = vpack.c.b16 %v526, %v525
      %v531 = vpack.c.b16 %v528, %v527
      %v532 = vpack.c.b16 %v529, %v529
      %vm533 = vcmask 523264
      %v535 = vsel %vm533, %v530, 0
      %v538 = vsel %vm533, %v531, 0
      %v541 = vsel %vm533, %v532, 0
      %543 = vmatprep.subr.bf16.mxu0 %v488
      %544 = vmatpush1.bf16.msra.mxu0 %v487
      %545 = vmatprep.subr.bf16.mxu0 %v490
      %546 = vmatpush1.bf16.msra.mxu0 %v489
      %547 = vmatprep.subr.bf16.mxu0 %v492
      %548 = vmatpush1.bf16.msra.mxu0 %v491
      %549 = vmatprep.subr.bf16.mxu0 %v494
      %550 = vmatpush1.bf16.msra.mxu0 %v493
      %551 = vmatprep.subr.bf16.mxu0 0
      %552 = vmatpush1.bf16.msra.mxu0 0
      %553 = vmatprep.subr.bf16.mxu0 0
      %554 = vmatpush1.bf16.msra.mxu0 0
      %555 = vmatprep.subr.bf16.mxu0 0
      %556 = vmatpush1.bf16.msra.mxu0 0
      %557 = vmatprep.subr.bf16.mxu0 0
      %558 = vmatpush1.bf16.msra.mxu0 0
      %559 = vmatprep.subr.bf16.mxu0 0
      %560 = vmatpush1.bf16.msra.mxu0 0
      %561 = vmatprep.subr.bf16.mxu0 0
      %562 = vmatpush1.bf16.msra.mxu0 0
      %563 = vmatprep.subr.bf16.mxu0 0
      %564 = vmatpush1.bf16.msra.mxu0 0
      %565 = vmatprep.subr.bf16.mxu0 0
      %566 = vmatpush1.bf16.msra.mxu0 0
      %567 = vmatprep.subr.bf16.mxu0 0
      %568 = vmatpush1.bf16.msra.mxu0 0
      %569 = vmatprep.subr.bf16.mxu0 0
      %570 = vmatpush1.bf16.msra.mxu0 0
      %571 = vmatprep.subr.bf16.mxu0 0
      %572 = vmatpush1.bf16.msra.mxu0 0
      %573 = vmatprep.subr.bf16.mxu0 0
      %574 = vmatpush1.bf16.msra.mxu0 0
      %575 = vmatprep.mubr.bf16.mxu0 0
      %576 = vmatmul.mubr.bf16.gmra.mrb[0].mxu0 %v535
      %v577 = vpop.f32.mrb[0].mxu0
      %v578 = vadd.f32 %v498, %v577
      %v579 = vpop.f32.mrb[0].mxu0
      %v580 = vadd.f32 %v498, %v579
      %v581 = vpop.f32.mrb[0].mxu0
      %v582 = vadd.f32 %v503, %v581
      %v583 = vpop.f32.mrb[0].mxu0
      %v584 = vadd.f32 %v503, %v583
      %585 = vmatprep.mubr.bf16.mxu0 0
      %586 = vmatmul.mubr.bf16.gmra.mrb[0].mxu0 %v538
      %v587 = vpop.f32.mrb[0].mxu0
      %v588 = vadd.f32 %v508, %v587
      %v589 = vpop.f32.mrb[0].mxu0
      %v590 = vadd.f32 %v508, %v589
      %v591 = vpop.f32.mrb[0].mxu0
      %v592 = vadd.f32 %v513, %v591
      %v593 = vpop.f32.mrb[0].mxu0
      %v594 = vadd.f32 %v513, %v593
      %595 = vmatprep.mubr.bf16.mxu0 0
      %596 = vmatmul.mubr.bf16.gmra.mrb[0].mxu0 %v541
      %v597 = vpop.f32.mrb[0].mxu0
      %v598 = vadd.f32 %v518, %v597
      %v599 = vpop.f32.mrb[0].mxu0
      %v600 = vadd.f32 %v518, %v599
      %v601 = vpop.f32.mrb[0].mxu0
      %v602 = vpop.f32.mrb[0].mxu0
      %603 = vdwg.mxu0
      %v604 = vmax.f32 %v578, 0.0
      %v605 = vmax.f32 %v580, 0.0
      %v606 = vmax.f32 %v582, 0.0
      %v607 = vmax.f32 %v584, 0.0
      %v608 = vmax.f32 %v588, 0.0
      %v609 = vmax.f32 %v590, 0.0
      %v610 = vmax.f32 %v592, 0.0
      %v611 = vmax.f32 %v594, 0.0
      %v612 = vmax.f32 %v598, 0.0
      %v613 = vmax.f32 %v600, 0.0
      %v614 = vpack.c.bf16 %v606, %v604
      %v615 = vpack.c.bf16 %v607, %v605
      %v616 = vpack.c.bf16 %v610, %v608
      %v617 = vpack.c.bf16 %v611, %v609
      %v618 = vpack.c.bf16 %v612, %v612
      %v619 = vpack.c.bf16 %v613, %v613
      %621 = vset.pattern.permute.xlu0 0
      %622 = vperm.xlu0 %621, %v439
      %v623 = vpop.permute.xlu0 %622
      %626 = vset.pattern.permute.xlu0 0
      %627 = vperm.xlu0 %626, %v440
      %v628 = vpop.permute.xlu0 %627
      %v632 = vunpack.c.l.b16 %v437
      %v633 = vunpack.c.l.b16 %v438
      %v634 = vpack.c.b16 %v633, %v632
      %vm635 = vcmask 326656
      %v637 = vsel %vm635, %v634, 0
      %vm639 = vcmask 1043456
      %v641 = vsel %vm639, %v618, 0
      %v644 = vsel %vm639, %v619, 0
      %646 = vmatprep.subr.bf16.mxu0 %v615
      %647 = vmatpush1.bf16.msra.mxu0 %v614
      %648 = vmatprep.subr.bf16.mxu0 %v617
      %649 = vmatpush1.bf16.msra.mxu0 %v616
      %650 = vmatprep.subr.bf16.mxu0 %v644
      %651 = vmatpush1.bf16.msra.mxu0 %v641
      %652 = vmatprep.subr.bf16.mxu0 0
      %653 = vmatpush1.bf16.msra.mxu0 0
      %654 = vmatprep.subr.bf16.mxu0 0
      %655 = vmatpush1.bf16.msra.mxu0 0
      %656 = vmatprep.subr.bf16.mxu0 0
      %657 = vmatpush1.bf16.msra.mxu0 0
      %658 = vmatprep.subr.bf16.mxu0 0
      %659 = vmatpush1.bf16.msra.mxu0 0
      %660 = vmatprep.subr.bf16.mxu0 0
      %661 = vmatpush1.bf16.msra.mxu0 0
      %662 = vmatprep.subr.bf16.mxu0 0
      %663 = vmatpush1.bf16.msra.mxu0 0
      %664 = vmatprep.subr.bf16.mxu0 0
      %665 = vmatpush1.bf16.msra.mxu0 0
      %666 = vmatprep.subr.bf16.mxu0 0
      %667 = vmatpush1.bf16.msra.mxu0 0
      %668 = vmatprep.subr.bf16.mxu0 0
      %669 = vmatpush1.bf16.msra.mxu0 0
      %670 = vmatprep.subr.bf16.mxu0 0
      %671 = vmatpush1.bf16.msra.mxu0 0
      %672 = vmatprep.subr.bf16.mxu0 0
      %673 = vmatpush1.bf16.msra.mxu0 0
      %674 = vmatprep.subr.bf16.mxu0 0
      %675 = vmatpush1.bf16.msra.mxu0 0
      %676 = vmatprep.subr.bf16.mxu0 0
      %677 = vmatpush1.bf16.msra.mxu0 0
      %678 = vmatprep.mubr.bf16.mxu0 0
      %679 = vmatmul.mubr.bf16.gmra.mrb[0].mxu0 %v637
      %v680 = vpop.f32.mrb[0].mxu0
      %v681 = vadd.f32 %v623, %v680
      %v682 = vpop.f32.mrb[0].mxu0
      %v683 = vadd.f32 %v623, %v682
      %v684 = vpop.f32.mrb[0].mxu0
      %v685 = vadd.f32 %v628, %v684
      %v686 = vpop.f32.mrb[0].mxu0
      %v687 = vadd.f32 %v628, %v686
      %688 = vdwg.mxu0
      %v689 = vmax.f32 %v681, 0.0
      %v690 = vmax.f32 %v683, 0.0
      %v691 = vmax.f32 %v685, 0.0
      %v692 = vmax.f32 %v687, 0.0
      %v693 = vpack.c.bf16 %v691, %v689
      %v694 = vpack.c.bf16 %v692, %v690
      %696 = vset.pattern.permute.xlu0 0
      %697 = vperm.xlu0 %696, %v443
      %v698 = vpop.permute.xlu0 %697
      %701 = vset.pattern.permute.xlu0 0
      %702 = vperm.xlu0 %701, %v444
      %v703 = vpop.permute.xlu0 %702
      %v707 = vunpack.c.l.b16 %v441
      %v708 = vunpack.c.l.b16 %v442
      %v709 = vpack.c.b16 %v708, %v707
      %vm710 = vcmask 130048
      %v712 = vsel %vm710, %v709, 0
      %714 = vmatprep.subr.bf16.mxu0 %v694
      %715 = vmatpush1.bf16.msra.mxu0 %v693
      %716 = vmatprep.subr.bf16.mxu0 0
      %717 = vmatpush1.bf16.msra.mxu0 0
      %718 = vmatprep.subr.bf16.mxu0 0
      %719 = vmatpush1.bf16.msra.mxu0 0
      %720 = vmatprep.subr.bf16.mxu0 0
      %721 = vmatpush1.bf16.msra.mxu0 0
      %722 = vmatprep.subr.bf16.mxu0 0
      %723 = vmatpush1.bf16.msra.mxu0 0
      %724 = vmatprep.subr.bf16.mxu0 0
      %725 = vmatpush1.bf16.msra.mxu0 0
      %726 = vmatprep.subr.bf16.mxu0 0
      %727 = vmatpush1.bf16.msra.mxu0 0
      %728 = vmatprep.subr.bf16.mxu0 0
      %729 = vmatpush1.bf16.msra.mxu0 0
      %730 = vmatprep.subr.bf16.mxu0 0
      %731 = vmatpush1.bf16.msra.mxu0 0
      %732 = vmatprep.subr.bf16.mxu0 0
      %733 = vmatpush1.bf16.msra.mxu0 0
      %734 = vmatprep.subr.bf16.mxu0 0
      %735 = vmatpush1.bf16.msra.mxu0 0
      %736 = vmatprep.subr.bf16.mxu0 0
      %737 = vmatpush1.bf16.msra.mxu0 0
      %738 = vmatprep.subr.bf16.mxu0 0
      %739 = vmatpush1.bf16.msra.mxu0 0
      %740 = vmatprep.subr.bf16.mxu0 0
      %741 = vmatpush1.bf16.msra.mxu0 0
      %742 = vmatprep.subr.bf16.mxu0 0
      %743 = vmatpush1.bf16.msra.mxu0 0
      %744 = vmatprep.subr.bf16.mxu0 0
      %745 = vmatpush1.bf16.msra.mxu0 0
      %746 = vmatprep.mubr.bf16.mxu0 0
      %747 = vmatmul.mubr.bf16.gmra.mrb[0].mxu0 %v712
      %v748 = vpop.f32.mrb[0].mxu0
      %v749 = vadd.f32 %v698, %v748
      %v750 = vpop.f32.mrb[0].mxu0
      %v751 = vadd.f32 %v698, %v750
      %v752 = vpop.f32.mrb[0].mxu0
      %v753 = vadd.f32 %v703, %v752
      %v754 = vpop.f32.mrb[0].mxu0
      %v755 = vadd.f32 %v703, %v754
      %756 = vdwg.mxu0
      %v757 = vmax.f32 %v749, 0.0
      %v758 = vmax.f32 %v751, 0.0
      %v759 = vmax.f32 %v753, 0.0
      %v760 = vmax.f32 %v755, 0.0
      %v761 = vpack.c.bf16 %v759, %v757
      %v762 = vpack.c.bf16 %v760, %v758
      %764 = vset.pattern.permute.xlu0 0
      %765 = vperm.xlu0 %764, %v450
      %v766 = vpop.permute.xlu0 %765
      %769 = vset.pattern.permute.xlu0 0
      %770 = vperm.xlu0 %769, %v451
      %v771 = vpop.permute.xlu0 %770
      %774 = vset.pattern.permute.xlu0 0
      %775 = vperm.xlu0 %774, %v452
      %v776 = vpop.permute.xlu0 %775
      %779 = vset.pattern.permute.xlu0 0
      %780 = vperm.xlu0 %779, %v453
      %v781 = vpop.permute.xlu0 %780
      %784 = vset.pattern.permute.xlu0 0
      %785 = vperm.xlu0 %784, %v454
      %v786 = vpop.permute.xlu0 %785
      %v793 = vunpack.c.l.b16 %v445
      %v794 = vunpack.c.l.b16 %v446
      %v795 = vunpack.c.l.b16 %v447
      %v796 = vunpack.c.l.b16 %v448
      %v797 = vunpack.c.l.b16 %v449
      %v798 = vpack.c.b16 %v794, %v793
      %v799 = vpack.c.b16 %v796, %v795
      %v800 = vpack.c.b16 %v797, %v797
      %v802 = vsel %vm710, %v798, 0
      %v805 = vsel %vm710, %v799, 0
      %v808 = vsel %vm710, %v800, 0
      %810 = vmatprep.subr.bf16.mxu0 %v762
      %811 = vmatpush1.bf16.msra.mxu0 %v761
      %812 = vmatprep.subr.bf16.mxu0 0
      %813 = vmatpush1.bf16.msra.mxu0 0
      %814 = vmatprep.subr.bf16.mxu0 0
      %815 = vmatpush1.bf16.msra.mxu0 0
      %816 = vmatprep.subr.bf16.mxu0 0
      %817 = vmatpush1.bf16.msra.mxu0 0
      %818 = vmatprep.subr.bf16.mxu0 0
      %819 = vmatpush1.bf16.msra.mxu0 0
      %820 = vmatprep.subr.bf16.mxu0 0
      %821 = vmatpush1.bf16.msra.mxu0 0
      %822 = vmatprep.subr.bf16.mxu0 0
      %823 = vmatpush1.bf16.msra.mxu0 0
      %824 = vmatprep.subr.bf16.mxu0 0
      %825 = vmatpush1.bf16.msra.mxu0 0
      %826 = vmatprep.subr.bf16.mxu0 0
      %827 = vmatpush1.bf16.msra.mxu0 0
      %828 = vmatprep.subr.bf16.mxu0 0
      %829 = vmatpush1.bf16.msra.mxu0 0
      %830 = vmatprep.subr.bf16.mxu0 0
      %831 = vmatpush1.bf16.msra.mxu0 0
      %832 = vmatprep.subr.bf16.mxu0 0
      %833 = vmatpush1.bf16.msra.mxu0 0
      %834 = vmatprep.subr.bf16.mxu0 0
      %835 = vmatpush1.bf16.msra.mxu0 0
      %836 = vmatprep.subr.bf16.mxu0 0
      %837 = vmatpush1.bf16.msra.mxu0 0
      %838 = vmatprep.subr.bf16.mxu0 0
      %839 = vmatpush1.bf16.msra.mxu0 0
      %840 = vmatprep.subr.bf16.mxu0 0
      %841 = vmatpush1.bf16.msra.mxu0 0
      %842 = vmatprep.mubr.bf16.mxu0 0
      %843 = vmatmul.mubr.bf16.gmra.mrb[0].mxu0 %v802
      %v844 = vpop.f32.mrb[0].mxu0
      %v845 = vadd.f32 %v766, %v844
      %v846 = vpop.f32.mrb[0].mxu0
      %v847 = vadd.f32 %v766, %v846
      %v848 = vpop.f32.mrb[0].mxu0
      %v849 = vadd.f32 %v771, %v848
      %v850 = vpop.f32.mrb[0].mxu0
      %v851 = vadd.f32 %v771, %v850
      %852 = vmatprep.mubr.bf16.mxu0 0
      %853 = vmatmul.mubr.bf16.gmra.mrb[0].mxu0 %v805
      %v854 = vpop.f32.mrb[0].mxu0
      %v855 = vadd.f32 %v776, %v854
      %v856 = vpop.f32.mrb[0].mxu0
      %v857 = vadd.f32 %v776, %v856
      %v858 = vpop.f32.mrb[0].mxu0
      %v859 = vadd.f32 %v781, %v858
      %v860 = vpop.f32.mrb[0].mxu0
      %v861 = vadd.f32 %v781, %v860
      %862 = vmatprep.mubr.bf16.mxu0 0
      %863 = vmatmul.mubr.bf16.gmra.mrb[0].mxu0 %v808
      %v864 = vpop.f32.mrb[0].mxu0
      %v865 = vadd.f32 %v786, %v864
      %v866 = vpop.f32.mrb[0].mxu0
      %v867 = vadd.f32 %v786, %v866
      %v868 = vpop.f32.mrb[0].mxu0
      %v869 = vpop.f32.mrb[0].mxu0
      %870 = vdwg.mxu0
      %v871 = vmax.f32 %v845, 0.0
      %v872 = vmax.f32 %v847, 0.0
      %v873 = vmax.f32 %v849, 0.0
      %v874 = vmax.f32 %v851, 0.0
      %v875 = vmax.f32 %v855, 0.0
      %v876 = vmax.f32 %v857, 0.0
      %v877 = vmax.f32 %v859, 0.0
      %v878 = vmax.f32 %v861, 0.0
      %v879 = vmax.f32 %v865, 0.0
      %v880 = vmax.f32 %v867, 0.0
      %v881 = vpack.c.bf16 %v873, %v871
      %v882 = vpack.c.bf16 %v874, %v872
      %v883 = vpack.c.bf16 %v877, %v875
      %v884 = vpack.c.bf16 %v878, %v876
      %v885 = vpack.c.bf16 %v879, %v879
      %v886 = vpack.c.bf16 %v880, %v880
      %888 = vset.pattern.permute.xlu0 0
      %889 = vperm.xlu0 %888, %v463
      %v890 = vpop.permute.xlu0 %889
      %893 = vset.pattern.permute.xlu0 0
      %894 = vperm.xlu0 %893, %v464
      %v895 = vpop.permute.xlu0 %894
      %898 = vset.pattern.permute.xlu0 0
      %899 = vperm.xlu0 %898, %v465
      %v900 = vpop.permute.xlu0 %899
      %903 = vset.pattern.permute.xlu0 0
      %904 = vperm.xlu0 %903, %v466
      %v905 = vpop.permute.xlu0 %904
      %908 = vset.pattern.permute.xlu0 0
      %909 = vperm.xlu0 %908, %v467
      %v910 = vpop.permute.xlu0 %909
      %913 = vset.pattern.permute.xlu0 0
      %914 = vperm.xlu0 %913, %v468
      %v915 = vpop.permute.xlu0 %914
      %918 = vset.pattern.permute.xlu0 0
      %919 = vperm.xlu0 %918, %v469
      %v920 = vpop.permute.xlu0 %919
      %923 = vset.pattern.permute.xlu0 0
      %924 = vperm.xlu0 %923, %v470
      %v925 = vpop.permute.xlu0 %924
      %v935 = vunpack.c.l.b16 %v455
      %v936 = vunpack.c.l.b16 %v456
      %v937 = vunpack.c.l.b16 %v457
      %v938 = vunpack.c.l.b16 %v458
      %v939 = vunpack.c.l.b16 %v459
      %v940 = vunpack.c.l.b16 %v460
      %v941 = vunpack.c.l.b16 %v461
      %v942 = vunpack.c.l.b16 %v462
      %v943 = vpack.c.b16 %v936, %v935
      %v944 = vpack.c.b16 %v938, %v937
      %v945 = vpack.c.b16 %v940, %v939
      %v946 = vpack.c.b16 %v942, %v941
      %v948 = vsel %vm635, %v943, 0
      %v951 = vsel %vm635, %v944, 0
      %v954 = vsel %vm635, %v945, 0
      %v957 = vsel %vm635, %v946, 0
      %v960 = vsel %vm639, %v885, 0
      %v963 = vsel %vm639, %v886, 0
      %965 = vmatprep.subr.bf16.mxu0 %v882
      %966 = vmatpush1.bf16.msra.mxu0 %v881
      %967 = vmatprep.subr.bf16.mxu0 %v884
      %968 = vmatpush1.bf16.msra.mxu0 %v883
      %969 = vmatprep.subr.bf16.mxu0 %v963
      %970 = vmatpush1.bf16.msra.mxu0 %v960
      %971 = vmatprep.subr.bf16.mxu0 0
      %972 = vmatpush1.bf16.msra.mxu0 0
      %973 = vmatprep.subr.bf16.mxu0 0
      %974 = vmatpush1.bf16.msra.mxu0 0
      %975 = vmatprep.subr.bf16.mxu0 0
      %976 = vmatpush1.bf16.msra.mxu0 0
      %977 = vmatprep.subr.bf16.mxu0 0
      %978 = vmatpush1.bf16.msra.mxu0 0
      %979 = vmatprep.subr.bf16.mxu0 0
      %980 = vmatpush1.bf16.msra.mxu0 0
      %981 = vmatprep.subr.bf16.mxu0 0
      %982 = vmatpush1.bf16.msra.mxu0 0
      %983 = vmatprep.subr.bf16.mxu0 0
      %984 = vmatpush1.bf16.msra.mxu0 0
      %985 = vmatprep.subr.bf16.mxu0 0
      %986 = vmatpush1.bf16.msra.mxu0 0
      %987 = vmatprep.subr.bf16.mxu0 0
      %988 = vmatpush1.bf16.msra.mxu0 0
      %989 = vmatprep.subr.bf16.mxu0 0
      %990 = vmatpush1.bf16.msra.mxu0 0
      %991 = vmatprep.subr.bf16.mxu0 0
      %992 = vmatpush1.bf16.msra.mxu0 0
      %993 = vmatprep.subr.bf16.mxu0 0
      %994 = vmatpush1.bf16.msra.mxu0 0
      %995 = vmatprep.subr.bf16.mxu0 0
      %996 = vmatpush1.bf16.msra.mxu0 0
      %997 = vmatprep.mubr.bf16.mxu0 0
      %998 = vmatmul.mubr.bf16.gmra.mrb[0].mxu0 %v948
      %v999 = vpop.f32.mrb[0].mxu0
      %v1000 = vadd.f32 %v890, %v999
      %v1001 = vpop.f32.mrb[0].mxu0
      %v1002 = vadd.f32 %v890, %v1001
      %v1003 = vpop.f32.mrb[0].mxu0
      %v1004 = vadd.f32 %v895, %v1003
      %v1005 = vpop.f32.mrb[0].mxu0
      %v1006 = vadd.f32 %v895, %v1005
      %1007 = vmatprep.mubr.bf16.mxu0 0
      %1008 = vmatmul.mubr.bf16.gmra.mrb[0].mxu0 %v951
      %v1009 = vpop.f32.mrb[0].mxu0
      %v1010 = vadd.f32 %v900, %v1009
      %v1011 = vpop.f32.mrb[0].mxu0
      %v1012 = vadd.f32 %v900, %v1011
      %v1013 = vpop.f32.mrb[0].mxu0
      %v1014 = vadd.f32 %v905, %v1013
      %v1015 = vpop.f32.mrb[0].mxu0
      %v1016 = vadd.f32 %v905, %v1015
      %1017 = vmatprep.mubr.bf16.mxu0 0
      %1018 = vmatmul.mubr.bf16.gmra.mrb[0].mxu0 %v954
      %v1019 = vpop.f32.mrb[0].mxu0
      %v1020 = vadd.f32 %v910, %v1019
      %v1021 = vpop.f32.mrb[0].mxu0
      %v1022 = vadd.f32 %v910, %v1021
      %v1023 = vpop.f32.mrb[0].mxu0
      %v1024 = vadd.f32 %v915, %v1023
      %v1025 = vpop.f32.mrb[0].mxu0
      %v1026 = vadd.f32 %v915, %v1025
      %1027 = vmatprep.mubr.bf16.mxu0 0
      %1028 = vmatmul.mubr.bf16.gmra.mrb[0].mxu0 %v957
      %v1029 = vpop.f32.mrb[0].mxu0
      %v1030 = vadd.f32 %v920, %v1029
      %v1031 = vpop.f32.mrb[0].mxu0
      %v1032 = vadd.f32 %v920, %v1031
      %v1033 = vpop.f32.mrb[0].mxu0
      %v1034 = vadd.f32 %v925, %v1033
      %v1035 = vpop.f32.mrb[0].mxu0
      %v1036 = vadd.f32 %v925, %v1035
      %1037 = vdwg.mxu0
      %1038 = vst [vmem:[%s424] sm:$0xff] %v1000
      %1039 = vst [vmem:[%s424 + $0x8] sm:$0xff] %v1002
      %1040 = vst [vmem:[%s424 + $0x10] sm:$0xff] %v1004
      %1041 = vst [vmem:[%s424 + $0x18] sm:$0xff] %v1006
      %1042 = vst [vmem:[%s424 + $0x20] sm:$0xff] %v1010
      %1043 = vst [vmem:[%s424 + $0x28] sm:$0xff] %v1012
      %1044 = vst [vmem:[%s424 + $0x30] sm:$0xff] %v1014
      %1045 = vst [vmem:[%s424 + $0x38] sm:$0xff] %v1016
      %1046 = vst [vmem:[%s424 + $0x40] sm:$0xff] %v1020
      %1047 = vst [vmem:[%s424 + $0x48] sm:$0xff] %v1022
      %1048 = vst [vmem:[%s424 + $0x50] sm:$0xff] %v1024
      %1049 = vst [vmem:[%s424 + $0x58] sm:$0xff] %v1026
      %1050 = vst [vmem:[%s424 + $0x60] sm:$0xff] %v1030
      %1051 = vst [vmem:[%s424 + $0x68] sm:$0xff] %v1032
      %1052 = vst [vmem:[%s424 + $0x70] sm:$0xff] %v1034
      %1053 = vst [vmem:[%s424 + $0x78] sm:$0xff] %v1036
      %s1054 = smul.u32 2, %s27
      %p1055 = scmp.lt.s32.totalorder %s26, 1
      %s1056 = scalar_select %p1055, %s26, 1
      %p1057 = scmp.lt.s32.totalorder %s1054, 1
      %s1058 = scalar_select %p1057, %s1054, 1
      %s1059 = smul.addr %s1056, 16
      %s1060 = sadd.s32 %s1058, %s1059
      %s1061 = smul.addr %s1060, 8
      %s1062 = scalar_lea.vmem %s11, %s1061
      // Predicated region
      $region65: #{feat_cae_forward.1} parent=63 // pred_check
        %p1063 = pneg %p292
      $region66: #{feat_cae_forward.1} parent=63 // pred_check_branch
        %1065 = sbr.rel (%p1063) target = $region68
      $region67: #{feat_cae_forward.1} parent=63 // pred_region
        %s1066 = smul.u32 2, %s27
      $region68: #{feat_cae_forward.1} parent=63 // pred_fallthru
        _
    $region64: #{feat_cae_forward.1} parent=5 // pred_fallthru
      _
    %p1067 = scmp.le.s32.totalorder 2, %s17
    // Predicated region
    $region69: #{feat_cae_forward.1} parent=5 // pred_check
      %p1068 = pneg %p1067
    $region70: #{feat_cae_forward.1} parent=5 // pred_check_branch
      %1070 = sbr.rel (%p1068) target = $region72
    $region71: #{feat_cae_forward.1} parent=5 // pred_region
      %s1071 = ssub.s32 %s17, 2
      // Predicated region
      $region73: #{feat_cae_forward.1} parent=71 // pred_check
        %p1072 = pneg %p298
      $region74: #{feat_cae_forward.1} parent=71 // pred_check_branch
        %1074 = sbr.rel (%p1072) target = $region76
      $region75: #{feat_cae_forward.1} parent=71 // pred_region
        %s1075 = smul.u32 2, %s29
        %p1076 = scmp.lt.s32.totalorder %s28, 1
        %s1077 = scalar_select %p1076, %s28, 1
        %p1078 = scmp.lt.s32.totalorder %s1075, 1
        %s1079 = scalar_select %p1078, %s1075, 1
        %s1080 = smul.addr %s1077, 16
        %s1081 = sadd.s32 %s1079, %s1080
        %s1082 = smul.addr %s1081, 8
        %s1083 = scalar_lea.vmem %s11, %s1082
      $region76: #{feat_cae_forward.1} parent=71 // pred_fallthru
        _
    $region72: #{feat_cae_forward.1} parent=5 // pred_fallthru
      _
  $region6: #{feat_cae_forward.1} parent=0 // loop_footer
    %s21 = sadd.s32 1, %s17
  $region7: #{feat_cae_forward.1} parent=0 // loop_footer_branch
    %16 = sbr.rel target = $region3
  $region8: #{feat_cae_forward.1} parent=0 // loop_exit
    _

</llo_original>
